<compile_context>
chip_gen: v7x
topology: tpu7x:2x2x1
jax: 0.10.0
libtpu: 0.0.40
codegen_flags: <defaults>
</compile_context>

<pallas_src>
import functools

import jax
import jax.numpy as jnp
import numpy as np
from jax import lax
from jax.experimental import pallas as pl
from jax.experimental.pallas import tpu as pltpu

EPS = 1e-5
MATMUL_DTYPE = jnp.bfloat16   # debug switch: jnp.float32 (exact, but emulated on the MXU)
PAD_TOP = 16                  # interior row offset in the padded scratch (tile aligned for
                              # both f32 (8-row) and bf16 (16-row) sublane tiling)


def _residual_block_kernel(x_ref, t1_ref, g1_ref, b1_ref, t2_ref, g2_ref, b2_ref,
                           out_ref, pad_ref, *, channels, batch):
    H, NWC = x_ref.shape                      # lane-dense activation: (H, N*W*C)
    C = channels
    W = NWC // (batch * C)
    rows = pad_ref.shape[0]
    inv_cnt = 1.0 / float(batch * H * W)      # BN sample count over (N, H, W)
    f32 = jnp.float32

    # Zero the top/bottom H-halo strips once (tile-aligned, full-128-lane stores).  The
    # interior rows [PAD_TOP, PAD_TOP+H) are overwritten in place for both convolutions,
    # and there is no W halo at all (out-of-range kw taps carry no weight).
    pad_ref[0:PAD_TOP, :] = jnp.zeros((PAD_TOP, NWC), pad_ref.dtype)
    pad_ref[PAD_TOP + H:rows, :] = jnp.zeros((rows - PAD_TOP - H, NWC), pad_ref.dtype)

    def conv3x3(t_ref):
        # 3 accumulating MXU matmuls, one per kh row shift.  The kw shifts, the ci->co
        # contraction and the batch block-diagonal are all folded into the (NWC, NWC)
        # block-Toeplitz weight, so every matmul is bf16 (H, 128) x (128, 128) with f32
        # accumulation -- no taps scratch, no slab copies.
        acc = jnp.zeros((H, NWC), f32)
        for kh in range(3):
            slab = pad_ref[PAD_TOP - 1 + kh:PAD_TOP - 1 + kh + H, :]
            acc = acc + jnp.dot(slab, t_ref[kh], preferred_element_type=f32)
        return acc

    def fold_channels(v):
        # v: (rows, N*W*C) per-lane totals.  Log-tree of circular lane rotations (XLU
        # slot, otherwise idle) sums the N*W lane groups, so every lane ends up holding
        # the total for its channel (lane % C), already broadcast across (N, W).
        # Requires N*W to be a power of two (asserted in the wrapper).
        shift = C
        while shift < NWC:
            v = v + pltpu.roll(v, shift, axis=1)
            shift *= 2
        return v

    def batchnorm(y, g_ref, b_ref):
        # Training-mode BatchNorm2d: biased variance over (N, H, W), single statistics
        # pass (sum + sum-of-squares), all f32 on the VPU; rsqrt runs on the EUP slot.
        s = jnp.sum(y, axis=0, keepdims=True)
        ss = jnp.sum(y * y, axis=0, keepdims=True)
        stats = fold_channels(jnp.concatenate([s, ss], axis=0))   # one fold tree for both
        mean = stats[0:1, :] * inv_cnt
        var = stats[1:2, :] * inv_cnt - mean * mean
        inv = lax.rsqrt(var + EPS)
        scale = g_ref[...] * inv              # gamma pre-tiled to (1, N*W*C)
        shift = b_ref[...] - mean * scale     # beta  pre-tiled to (1, N*W*C)
        return y * scale + shift

    # conv1 -> bn1 -> relu   (aligned, full-lane-width interior store)
    pad_ref[PAD_TOP:PAD_TOP + H, :] = x_ref[...].astype(pad_ref.dtype)
    h = jnp.maximum(batchnorm(conv3x3(t1_ref), g1_ref, b1_ref), 0.0)

    # conv2 -> bn2 -> +x -> relu   (reuse padded scratch; halo strips are still zero)
    pad_ref[PAD_TOP:PAD_TOP + H, :] = h.astype(pad_ref.dtype)
    y2 = batchnorm(conv3x3(t2_ref), g2_ref, b2_ref)
    out_ref[...] = jnp.maximum(y2 + x_ref[...], 0.0)


def _conv_toeplitz_kh(w_oihw, width, n_batch):
    """(Co, Ci, 3, 3) OIHW conv weight -> (3, N*W*Ci, N*W*Co) per-kh block-Toeplitz
    weights for the lane-dense (H, N*W*C) layout.  T[kh][b*W*C + w'*C + ci,
    b*W*C + w*C + co] = weight[kh, kw, ci, co] with w' = w + kw - 1; out-of-range taps
    are dropped (they would read zero padding), and the batch block-diagonal keeps
    batches independent inside the shared lane dimension."""
    w_hwio = jnp.transpose(w_oihw.astype(jnp.float32), (2, 3, 1, 0))   # (Kh, Kw, Ci, Co)
    Kh, Kw, Ci, Co = w_hwio.shape
    wi = np.arange(width)[None, :, None]                 # input column w' (tap position)
    wo = np.arange(width)[None, None, :]                 # output column w
    kw = np.arange(Kw)[:, None, None]
    sel = jnp.asarray((wi == wo + kw - 1).astype(np.float32))          # (Kw, W, W)
    t = jnp.einsum('kpw,xkio->xpiwo', sel, w_hwio)                     # (Kh, W, Ci, W, Co)
    t = t.reshape(Kh, width * Ci, width * Co)
    eye = jnp.eye(n_batch, dtype=jnp.float32)
    t_full = jnp.einsum('ab,xpq->xapbq', eye, t)                       # block-diag over N
    return t_full.reshape(Kh, n_batch * width * Ci, n_batch * width * Co)


@jax.jit
def residual_block_nchw(x_nchw, params):
    """x_nchw: (N, C, H, W); params = (w1_oihw, g1, b1, w2_oihw, g2, b2) (PyTorch layouts)."""
    w1, g1, b1, w2, g2, b2 = params
    N, C, H, W = x_nchw.shape
    NWC = N * W * C
    assert (N * W) & (N * W - 1) == 0, "N*W must be a power of two for the lane-roll fold"
    # TODO(synk): non-power-of-two N*W needs a small fold-matrix matmul instead of rolls.

    # Lane-dense layout: fold batch into the lane dim -> (H, N*W*C).  With N=2, W=16,
    # C=4 the last dim is exactly 128: unmasked vst, full MXU output-column fill.
    x2 = jnp.transpose(x_nchw, (2, 0, 3, 1)).reshape(H, NWC).astype(jnp.float32)

    t1 = _conv_toeplitz_kh(w1, W, N).astype(MATMUL_DTYPE)
    t2 = _conv_toeplitz_kh(w2, W, N).astype(MATMUL_DTYPE)
    # gamma/beta pre-tiled across (N, W) so BN never leaves the (.., N*W*C) lane layout.
    g1t, b1t, g2t, b2t = (jnp.tile(v.reshape(1, C).astype(jnp.float32), (1, N * W))
                          for v in (g1, b1, g2, b2))

    pad_rows = 2 * PAD_TOP + H
    pad_bytes = pad_rows * NWC * jnp.dtype(MATMUL_DTYPE).itemsize
    out_bytes = H * NWC * 4
    footprint = (sum(a.size * a.dtype.itemsize for a in (x2, t1, t2, g1t, b1t, g2t, b2t))
                 + pad_bytes + out_bytes)
    vmem_limit = max(4 * footprint, 4 * 1024 * 1024)     # headroom for compiler scratch

    vmem = pl.BlockSpec(memory_space=pltpu.MemorySpace.VMEM)
    kernel = functools.partial(_residual_block_kernel, channels=C, batch=N)
    out2 = pl.pallas_call(
        kernel,
        out_shape=jax.ShapeDtypeStruct((H, NWC), jnp.float32),
        in_specs=[vmem] * 7,
        out_specs=vmem,
        scratch_shapes=[pltpu.VMEM((pad_rows, NWC), MATMUL_DTYPE)],   # padded activation
        compiler_params=pltpu.CompilerParams(vmem_limit_bytes=int(vmem_limit)),
    )(x2, t1, g1t, b1t, t2, g2t, b2t)

    return jnp.transpose(out2.reshape(H, N, W, C), (1, 3, 0, 2))      # back to NCHW


# ---------------- plain-JAX f32 reference (for verification only) ----------------
def _oihw_to_hwio(w):
    return jnp.transpose(w, (2, 3, 1, 0))


def _ref_block_nhwc(x, w1_hwio, g1, b1, w2_hwio, g2, b2):
    def conv(a, w):
        return lax.conv_general_dilated(a, w, (1, 1), 'SAME',
                                        dimension_numbers=('NHWC', 'HWIO', 'NHWC'))

    def bn(y, g, b):
        m = y.mean(axis=(0, 1, 2), keepdims=True)
        v = ((y - m) ** 2).mean(axis=(0, 1, 2), keepdims=True)
        return (y - m) * lax.rsqrt(v + EPS) * g.reshape(1, 1, 1, -1) + b.reshape(1, 1, 1, -1)

    h = jnp.maximum(bn(conv(x, w1_hwio), g1, b1), 0.0)
    return jnp.maximum(bn(conv(h, w2_hwio), g2, b2) + x, 0.0)


if __name__ == "__main__":
    N, C, H, W = 2, 4, 16, 16

    key = jax.random.PRNGKey(0)
    kx, k1, k2, kg1, kb1, kg2, kb2 = jax.random.split(key, 7)

    x_nchw = jax.random.normal(kx, (N, C, H, W), jnp.float32)

    # Deterministic synthetic parameters in PyTorch layouts (Conv2d weight = OIHW).
    w1 = jax.random.normal(k1, (C, C, 3, 3), jnp.float32) * 0.1
    w2 = jax.random.normal(k2, (C, C, 3, 3), jnp.float32) * 0.1
    g1 = 1.0 + 0.1 * jax.random.normal(kg1, (C,), jnp.float32)
    b1 = 0.1 * jax.random.normal(kb1, (C,), jnp.float32)
    g2 = 1.0 + 0.1 * jax.random.normal(kg2, (C,), jnp.float32)
    b2 = 0.1 * jax.random.normal(kb2, (C,), jnp.float32)

    params = (w1, g1, b1, w2, g2, b2)

    out = jax.block_until_ready(residual_block_nchw(x_nchw, params))

    # Verify against a plain-JAX f32 reference of the same forward pass.
    x_nhwc = jnp.transpose(x_nchw, (0, 2, 3, 1))
    ref = _ref_block_nhwc(x_nhwc, _oihw_to_hwio(w1), g1, b1, _oihw_to_hwio(w2), g2, b2)
    ref = jnp.transpose(ref, (0, 3, 1, 2))

    tol = 2e-2 if MATMUL_DTYPE is jnp.bfloat16 else 1e-4   # bf16 MXU operands vs f32 ref
    np.testing.assert_allclose(np.asarray(out), np.asarray(ref), rtol=tol, atol=tol)

    print("KERNEL_OK")
</pallas_src>

<mosaic_0001>
module attributes {stable_mosaic.version = 11 : i64} {
  func.func @_residual_block_kernel(%arg0: memref<16x128xf32, #tpu.memory_space<vmem>>, %arg1: memref<3x128x128xbf16, #tpu.memory_space<vmem>>, %arg2: memref<1x128xf32, #tpu.memory_space<vmem>>, %arg3: memref<1x128xf32, #tpu.memory_space<vmem>>, %arg4: memref<3x128x128xbf16, #tpu.memory_space<vmem>>, %arg5: memref<1x128xf32, #tpu.memory_space<vmem>>, %arg6: memref<1x128xf32, #tpu.memory_space<vmem>>, %arg7: memref<16x128xf32, #tpu.memory_space<vmem>>, %arg8: memref<48x128xbf16, #tpu.memory_space<vmem>>) attributes {dimension_semantics = [], scalar_prefetch = 0 : i64, scratch_operands = 1 : i64, tpu.core_type = #tpu.core_type<tc>} {
    %cst = arith.constant 0.000000e+00 : bf16
    %0 = vector.broadcast %cst : bf16 to vector<16x128xbf16>
    %c0 = arith.constant 0 : index
    %c0_0 = arith.constant 0 : index
    %1 = vector.load %arg8[%c0, %c0_0] : memref<48x128xbf16, #tpu.memory_space<vmem>>, vector<16x128xbf16>
    tpu.vector_store %arg8[%c0, %c0_0], %0 {strides = array<i32>} : memref<48x128xbf16, #tpu.memory_space<vmem>>, vector<16x128xbf16>,
    %cst_1 = arith.constant 0.000000e+00 : bf16
    %2 = vector.broadcast %cst_1 : bf16 to vector<16x128xbf16>
    %c32 = arith.constant 32 : index
    %c0_2 = arith.constant 0 : index
    %3 = vector.load %arg8[%c32, %c0_2] : memref<48x128xbf16, #tpu.memory_space<vmem>>, vector<16x128xbf16>
    tpu.vector_store %arg8[%c32, %c0_2], %2 {strides = array<i32>} : memref<48x128xbf16, #tpu.memory_space<vmem>>, vector<16x128xbf16>,
    %c0_3 = arith.constant 0 : index
    %c0_4 = arith.constant 0 : index
    %4 = vector.load %arg0[%c0_3, %c0_4] : memref<16x128xf32, #tpu.memory_space<vmem>>, vector<16x128xf32>
    %5 = arith.truncf %4 : vector<16x128xf32> to vector<16x128xbf16>
    %c16 = arith.constant 16 : index
    %c0_5 = arith.constant 0 : index
    %6 = vector.load %arg8[%c16, %c0_5] : memref<48x128xbf16, #tpu.memory_space<vmem>>, vector<16x128xbf16>
    tpu.vector_store %arg8[%c16, %c0_5], %5 {strides = array<i32>} : memref<48x128xbf16, #tpu.memory_space<vmem>>, vector<16x128xbf16>,
    %cst_6 = arith.constant 0.000000e+00 : f32
    %7 = vector.broadcast %cst_6 : f32 to vector<16x128xf32>
    %c15 = arith.constant 15 : index
    %c0_7 = arith.constant 0 : index
    %8 = vector.load %arg8[%c15, %c0_7] : memref<48x128xbf16, #tpu.memory_space<vmem>>, vector<16x128xbf16>
    %c0_8 = arith.constant 0 : index
    %c0_9 = arith.constant 0 : index
    %c0_10 = arith.constant 0 : index
    %9 = vector.load %arg1[%c0_8, %c0_9, %c0_10] : memref<3x128x128xbf16, #tpu.memory_space<vmem>>, vector<1x128x128xbf16>
    %10 = vector.shape_cast %9 : vector<1x128x128xbf16> to vector<128x128xbf16>
    %cst_11 = arith.constant dense<0.000000e+00> : vector<16x128xf32>
    %11 = tpu.matmul %8, %10, %cst_11 {dimension_numbers = #tpu.dot_dimension_numbers<[1], [0], [0], [1], [0, 0, 1, 1], [], []>} : vector<16x128xbf16>, vector<128x128xbf16>, vector<16x128xf32> -> vector<16x128xf32>
    %12 = arith.addf %7, %11 : vector<16x128xf32>
    %c16_12 = arith.constant 16 : index
    %c0_13 = arith.constant 0 : index
    %13 = vector.load %arg8[%c16_12, %c0_13] : memref<48x128xbf16, #tpu.memory_space<vmem>>, vector<16x128xbf16>
    %c1 = arith.constant 1 : index
    %c0_14 = arith.constant 0 : index
    %c0_15 = arith.constant 0 : index
    %14 = vector.load %arg1[%c1, %c0_14, %c0_15] : memref<3x128x128xbf16, #tpu.memory_space<vmem>>, vector<1x128x128xbf16>
    %15 = vector.shape_cast %14 : vector<1x128x128xbf16> to vector<128x128xbf16>
    %cst_16 = arith.constant dense<0.000000e+00> : vector<16x128xf32>
    %16 = tpu.matmul %13, %15, %cst_16 {dimension_numbers = #tpu.dot_dimension_numbers<[1], [0], [0], [1], [0, 0, 1, 1], [], []>} : vector<16x128xbf16>, vector<128x128xbf16>, vector<16x128xf32> -> vector<16x128xf32>
    %17 = arith.addf %12, %16 : vector<16x128xf32>
    %c17 = arith.constant 17 : index
    %c0_17 = arith.constant 0 : index
    %18 = vector.load %arg8[%c17, %c0_17] : memref<48x128xbf16, #tpu.memory_space<vmem>>, vector<16x128xbf16>
    %c2 = arith.constant 2 : index
    %c0_18 = arith.constant 0 : index
    %c0_19 = arith.constant 0 : index
    %19 = vector.load %arg1[%c2, %c0_18, %c0_19] : memref<3x128x128xbf16, #tpu.memory_space<vmem>>, vector<1x128x128xbf16>
    %20 = vector.shape_cast %19 : vector<1x128x128xbf16> to vector<128x128xbf16>
    %cst_20 = arith.constant dense<0.000000e+00> : vector<16x128xf32>
    %21 = tpu.matmul %18, %20, %cst_20 {dimension_numbers = #tpu.dot_dimension_numbers<[1], [0], [0], [1], [0, 0, 1, 1], [], []>} : vector<16x128xbf16>, vector<128x128xbf16>, vector<16x128xf32> -> vector<16x128xf32>
    %22 = arith.addf %17, %21 : vector<16x128xf32>
    %cst_21 = arith.constant dense<0.000000e+00> : vector<128xf32>
    %23 = vector.multi_reduction <add>, %22, %cst_21 [0] : vector<16x128xf32> to vector<128xf32>
    %24 = vector.shape_cast %23 : vector<128xf32> to vector<1x128xf32>
    %25 = arith.mulf %22, %22 : vector<16x128xf32>
    %cst_22 = arith.constant dense<0.000000e+00> : vector<128xf32>
    %26 = vector.multi_reduction <add>, %25, %cst_22 [0] : vector<16x128xf32> to vector<128xf32>
    %27 = vector.shape_cast %26 : vector<128xf32> to vector<1x128xf32>
    %28 = tpu.concatenate %24, %27 in 0 : vector<1x128xf32>, vector<1x128xf32> -> vector<2x128xf32>
    %c4_i32 = arith.constant 4 : i32
    %29 = tpu.dynamic_rotate %28 by %c4_i32 dim 1 : vector<2x128xf32>, i32 -> vector<2x128xf32>
    %30 = arith.addf %28, %29 : vector<2x128xf32>
    %c8_i32 = arith.constant 8 : i32
    %31 = tpu.dynamic_rotate %30 by %c8_i32 dim 1 : vector<2x128xf32>, i32 -> vector<2x128xf32>
    %32 = arith.addf %30, %31 : vector<2x128xf32>
    %c16_i32 = arith.constant 16 : i32
    %33 = tpu.dynamic_rotate %32 by %c16_i32 dim 1 : vector<2x128xf32>, i32 -> vector<2x128xf32>
    %34 = arith.addf %32, %33 : vector<2x128xf32>
    %c32_i32 = arith.constant 32 : i32
    %35 = tpu.dynamic_rotate %34 by %c32_i32 dim 1 : vector<2x128xf32>, i32 -> vector<2x128xf32>
    %36 = arith.addf %34, %35 : vector<2x128xf32>
    %c64_i32 = arith.constant 64 : i32
    %37 = tpu.dynamic_rotate %36 by %c64_i32 dim 1 : vector<2x128xf32>, i32 -> vector<2x128xf32>
    %38 = arith.addf %36, %37 : vector<2x128xf32>
    %39 = vector.extract_strided_slice %38 {offsets = [0, 0], sizes = [1, 128], strides = [1, 1]} : vector<2x128xf32> to vector<1x128xf32>
    %cst_23 = arith.constant 0.001953125 : f32
    %40 = vector.broadcast %cst_23 : f32 to vector<1x128xf32>
    %41 = arith.mulf %39, %40 : vector<1x128xf32>
    %42 = vector.extract_strided_slice %38 {offsets = [1, 0], sizes = [1, 128], strides = [1, 1]} : vector<2x128xf32> to vector<1x128xf32>
    %cst_24 = arith.constant 0.001953125 : f32
    %43 = vector.broadcast %cst_24 : f32 to vector<1x128xf32>
    %44 = arith.mulf %42, %43 : vector<1x128xf32>
    %45 = arith.mulf %41, %41 : vector<1x128xf32>
    %46 = arith.subf %44, %45 : vector<1x128xf32>
    %cst_25 = arith.constant 9.99999974E-6 : f32
    %47 = vector.broadcast %cst_25 : f32 to vector<1x128xf32>
    %48 = arith.addf %46, %47 : vector<1x128xf32>
    %49 = math.rsqrt %48 : vector<1x128xf32>
    %c0_26 = arith.constant 0 : index
    %c0_27 = arith.constant 0 : index
    %50 = vector.load %arg2[%c0_26, %c0_27] : memref<1x128xf32, #tpu.memory_space<vmem>>, vector<1x128xf32>
    %51 = arith.mulf %50, %49 : vector<1x128xf32>
    %c0_28 = arith.constant 0 : index
    %c0_29 = arith.constant 0 : index
    %52 = vector.load %arg3[%c0_28, %c0_29] : memref<1x128xf32, #tpu.memory_space<vmem>>, vector<1x128xf32>
    %53 = arith.mulf %41, %51 : vector<1x128xf32>
    %54 = arith.subf %52, %53 : vector<1x128xf32>
    %55 = vector.broadcast %51 : vector<1x128xf32> to vector<16x128xf32>
    %56 = arith.mulf %22, %55 : vector<16x128xf32>
    %57 = vector.broadcast %54 : vector<1x128xf32> to vector<16x128xf32>
    %58 = arith.addf %56, %57 : vector<16x128xf32>
    %cst_30 = arith.constant 0.000000e+00 : f32
    %59 = vector.broadcast %cst_30 : f32 to vector<16x128xf32>
    %60 = arith.maximumf %58, %59 : vector<16x128xf32>
    %61 = arith.truncf %60 : vector<16x128xf32> to vector<16x128xbf16>
    %c16_31 = arith.constant 16 : index
    %c0_32 = arith.constant 0 : index
    %62 = vector.load %arg8[%c16_31, %c0_32] : memref<48x128xbf16, #tpu.memory_space<vmem>>, vector<16x128xbf16>
    tpu.vector_store %arg8[%c16_31, %c0_32], %61 {strides = array<i32>} : memref<48x128xbf16, #tpu.memory_space<vmem>>, vector<16x128xbf16>,
    %cst_33 = arith.constant 0.000000e+00 : f32
    %63 = vector.broadcast %cst_33 : f32 to vector<16x128xf32>
    %c15_34 = arith.constant 15 : index
    %c0_35 = arith.constant 0 : index
    %64 = vector.load %arg8[%c15_34, %c0_35] : memref<48x128xbf16, #tpu.memory_space<vmem>>, vector<16x128xbf16>
    %c0_36 = arith.constant 0 : index
    %c0_37 = arith.constant 0 : index
    %c0_38 = arith.constant 0 : index
    %65 = vector.load %arg4[%c0_36, %c0_37, %c0_38] : memref<3x128x128xbf16, #tpu.memory_space<vmem>>, vector<1x128x128xbf16>
    %66 = vector.shape_cast %65 : vector<1x128x128xbf16> to vector<128x128xbf16>
    %cst_39 = arith.constant dense<0.000000e+00> : vector<16x128xf32>
    %67 = tpu.matmul %64, %66, %cst_39 {dimension_numbers = #tpu.dot_dimension_numbers<[1], [0], [0], [1], [0, 0, 1, 1], [], []>} : vector<16x128xbf16>, vector<128x128xbf16>, vector<16x128xf32> -> vector<16x128xf32>
    %68 = arith.addf %63, %67 : vector<16x128xf32>
    %c16_40 = arith.constant 16 : index
    %c0_41 = arith.constant 0 : index
    %69 = vector.load %arg8[%c16_40, %c0_41] : memref<48x128xbf16, #tpu.memory_space<vmem>>, vector<16x128xbf16>
    %c1_42 = arith.constant 1 : index
    %c0_43 = arith.constant 0 : index
    %c0_44 = arith.constant 0 : index
    %70 = vector.load %arg4[%c1_42, %c0_43, %c0_44] : memref<3x128x128xbf16, #tpu.memory_space<vmem>>, vector<1x128x128xbf16>
    %71 = vector.shape_cast %70 : vector<1x128x128xbf16> to vector<128x128xbf16>
    %cst_45 = arith.constant dense<0.000000e+00> : vector<16x128xf32>
    %72 = tpu.matmul %69, %71, %cst_45 {dimension_numbers = #tpu.dot_dimension_numbers<[1], [0], [0], [1], [0, 0, 1, 1], [], []>} : vector<16x128xbf16>, vector<128x128xbf16>, vector<16x128xf32> -> vector<16x128xf32>
    %73 = arith.addf %68, %72 : vector<16x128xf32>
    %c17_46 = arith.constant 17 : index
    %c0_47 = arith.constant 0 : index
    %74 = vector.load %arg8[%c17_46, %c0_47] : memref<48x128xbf16, #tpu.memory_space<vmem>>, vector<16x128xbf16>
    %c2_48 = arith.constant 2 : index
    %c0_49 = arith.constant 0 : index
    %c0_50 = arith.constant 0 : index
    %75 = vector.load %arg4[%c2_48, %c0_49, %c0_50] : memref<3x128x128xbf16, #tpu.memory_space<vmem>>, vector<1x128x128xbf16>
    %76 = vector.shape_cast %75 : vector<1x128x128xbf16> to vector<128x128xbf16>
    %cst_51 = arith.constant dense<0.000000e+00> : vector<16x128xf32>
    %77 = tpu.matmul %74, %76, %cst_51 {dimension_numbers = #tpu.dot_dimension_numbers<[1], [0], [0], [1], [0, 0, 1, 1], [], []>} : vector<16x128xbf16>, vector<128x128xbf16>, vector<16x128xf32> -> vector<16x128xf32>
    %78 = arith.addf %73, %77 : vector<16x128xf32>
    %cst_52 = arith.constant dense<0.000000e+00> : vector<128xf32>
    %79 = vector.multi_reduction <add>, %78, %cst_52 [0] : vector<16x128xf32> to vector<128xf32>
    %80 = vector.shape_cast %79 : vector<128xf32> to vector<1x128xf32>
    %81 = arith.mulf %78, %78 : vector<16x128xf32>
    %cst_53 = arith.constant dense<0.000000e+00> : vector<128xf32>
    %82 = vector.multi_reduction <add>, %81, %cst_53 [0] : vector<16x128xf32> to vector<128xf32>
    %83 = vector.shape_cast %82 : vector<128xf32> to vector<1x128xf32>
    %84 = tpu.concatenate %80, %83 in 0 : vector<1x128xf32>, vector<1x128xf32> -> vector<2x128xf32>
    %c4_i32_54 = arith.constant 4 : i32
    %85 = tpu.dynamic_rotate %84 by %c4_i32_54 dim 1 : vector<2x128xf32>, i32 -> vector<2x128xf32>
    %86 = arith.addf %84, %85 : vector<2x128xf32>
    %c8_i32_55 = arith.constant 8 : i32
    %87 = tpu.dynamic_rotate %86 by %c8_i32_55 dim 1 : vector<2x128xf32>, i32 -> vector<2x128xf32>
    %88 = arith.addf %86, %87 : vector<2x128xf32>
    %c16_i32_56 = arith.constant 16 : i32
    %89 = tpu.dynamic_rotate %88 by %c16_i32_56 dim 1 : vector<2x128xf32>, i32 -> vector<2x128xf32>
    %90 = arith.addf %88, %89 : vector<2x128xf32>
    %c32_i32_57 = arith.constant 32 : i32
    %91 = tpu.dynamic_rotate %90 by %c32_i32_57 dim 1 : vector<2x128xf32>, i32 -> vector<2x128xf32>
    %92 = arith.addf %90, %91 : vector<2x128xf32>
    %c64_i32_58 = arith.constant 64 : i32
    %93 = tpu.dynamic_rotate %92 by %c64_i32_58 dim 1 : vector<2x128xf32>, i32 -> vector<2x128xf32>
    %94 = arith.addf %92, %93 : vector<2x128xf32>
    %95 = vector.extract_strided_slice %94 {offsets = [0, 0], sizes = [1, 128], strides = [1, 1]} : vector<2x128xf32> to vector<1x128xf32>
    %cst_59 = arith.constant 0.001953125 : f32
    %96 = vector.broadcast %cst_59 : f32 to vector<1x128xf32>
    %97 = arith.mulf %95, %96 : vector<1x128xf32>
    %98 = vector.extract_strided_slice %94 {offsets = [1, 0], sizes = [1, 128], strides = [1, 1]} : vector<2x128xf32> to vector<1x128xf32>
    %cst_60 = arith.constant 0.001953125 : f32
    %99 = vector.broadcast %cst_60 : f32 to vector<1x128xf32>
    %100 = arith.mulf %98, %99 : vector<1x128xf32>
    %101 = arith.mulf %97, %97 : vector<1x128xf32>
    %102 = arith.subf %100, %101 : vector<1x128xf32>
    %cst_61 = arith.constant 9.99999974E-6 : f32
    %103 = vector.broadcast %cst_61 : f32 to vector<1x128xf32>
    %104 = arith.addf %102, %103 : vector<1x128xf32>
    %105 = math.rsqrt %104 : vector<1x128xf32>
    %c0_62 = arith.constant 0 : index
    %c0_63 = arith.constant 0 : index
    %106 = vector.load %arg5[%c0_62, %c0_63] : memref<1x128xf32, #tpu.memory_space<vmem>>, vector<1x128xf32>
    %107 = arith.mulf %106, %105 : vector<1x128xf32>
    %c0_64 = arith.constant 0 : index
    %c0_65 = arith.constant 0 : index
    %108 = vector.load %arg6[%c0_64, %c0_65] : memref<1x128xf32, #tpu.memory_space<vmem>>, vector<1x128xf32>
    %109 = arith.mulf %97, %107 : vector<1x128xf32>
    %110 = arith.subf %108, %109 : vector<1x128xf32>
    %111 = vector.broadcast %107 : vector<1x128xf32> to vector<16x128xf32>
    %112 = arith.mulf %78, %111 : vector<16x128xf32>
    %113 = vector.broadcast %110 : vector<1x128xf32> to vector<16x128xf32>
    %114 = arith.addf %112, %113 : vector<16x128xf32>
    %c0_66 = arith.constant 0 : index
    %c0_67 = arith.constant 0 : index
    %115 = vector.load %arg0[%c0_66, %c0_67] : memref<16x128xf32, #tpu.memory_space<vmem>>, vector<16x128xf32>
    %116 = arith.addf %114, %115 : vector<16x128xf32>
    %cst_68 = arith.constant 0.000000e+00 : f32
    %117 = vector.broadcast %cst_68 : f32 to vector<16x128xf32>
    %118 = arith.maximumf %116, %117 : vector<16x128xf32>
    %c0_69 = arith.constant 0 : index
    %c0_70 = arith.constant 0 : index
    %119 = vector.load %arg7[%c0_69, %c0_70] : memref<16x128xf32, #tpu.memory_space<vmem>>, vector<16x128xf32>
    tpu.vector_store %arg7[%c0_69, %c0_70], %118 {strides = array<i32>} : memref<16x128xf32, #tpu.memory_space<vmem>>, vector<16x128xf32>,
    return
  }
}

</mosaic_0001>

<llo_original>
// kernel: residual_block_nchw.1
$region0: #{residual_block_nchw.1}
  #allocation0 [shape = 'u32[]', space=smem, size = 0x4, offset = 0x4, fixed_abs, tag = 'smem constant byte address 0x4 - core index']
  #allocation1 [shape = 'u32[144,128]{1,0:T(1,128)}', space=vmem, size = 0x12000, scoped, tag = 'internal scratch']
  #allocation2 [shape = 'bf16[48,128]{1,0:T(16,128)(2,1)}', space=vmem, size = 0x3000, scoped, tag = 'scratch operand']
  %s0 = inlined_call_operand.vmem [shape: f32[16,128], index: 0, kind: input, shape index: {}]
  %s1 = inlined_call_operand.vmem [shape: bf16[3,128,128], index: 1, kind: input, shape index: {}]
  %s2 = inlined_call_operand.vmem [shape: f32[1,128], index: 2, kind: input, shape index: {}]
  %s3 = inlined_call_operand.vmem [shape: f32[1,128], index: 3, kind: input, shape index: {}]
  %s4 = inlined_call_operand.vmem [shape: bf16[3,128,128], index: 4, kind: input, shape index: {}]
  %s5 = inlined_call_operand.vmem [shape: f32[1,128], index: 5, kind: input, shape index: {}]
  %s6 = inlined_call_operand.vmem [shape: f32[1,128], index: 6, kind: input, shape index: {}]
  %s7 = inlined_call_operand.vmem [shape: f32[16,128], index: 7, kind: output, shape index: {}]
  %s8 = sld [smem:[#allocation0]]
  $region38: #{residual_block_nchw.1} parent=0
    _
  %s10 = ssub.s32 1, %s8
  %s11 = scalar_select 0, %s10, %s8
  // Predicated region
  $region2: #{residual_block_nchw.1} parent=0 // pred_check
    _
  $region3: #{residual_block_nchw.1} parent=0 // pred_check_branch
    %13 = sbr.rel (0) target = $region5
  $region4: #{residual_block_nchw.1} parent=0 // pred_region
    _
  $region5: #{residual_block_nchw.1} parent=0 // pred_fallthru
    _
  // Predicated region
  $region6: #{residual_block_nchw.1} parent=0 // pred_check
    _
  $region7: #{residual_block_nchw.1} parent=0 // pred_check_branch
    %15 = sbr.rel (0) target = $region9
  $region8: #{residual_block_nchw.1} parent=0 // pred_region
    _
  $region9: #{residual_block_nchw.1} parent=0 // pred_fallthru
    _
  // Predicated region
  $region10: #{residual_block_nchw.1} parent=0 // pred_check
    _
  $region11: #{residual_block_nchw.1} parent=0 // pred_check_branch
    %17 = sbr.rel (0) target = $region13
  $region12: #{residual_block_nchw.1} parent=0 // pred_region
    _
  $region13: #{residual_block_nchw.1} parent=0 // pred_fallthru
    _
  // Predicated region
  $region14: #{residual_block_nchw.1} parent=0 // pred_check
    _
  $region15: #{residual_block_nchw.1} parent=0 // pred_check_branch
    %19 = sbr.rel (0) target = $region17
  $region16: #{residual_block_nchw.1} parent=0 // pred_region
    _
  $region17: #{residual_block_nchw.1} parent=0 // pred_fallthru
    _
  // Predicated region
  $region18: #{residual_block_nchw.1} parent=0 // pred_check
    _
  $region19: #{residual_block_nchw.1} parent=0 // pred_check_branch
    %21 = sbr.rel (0) target = $region21
  $region20: #{residual_block_nchw.1} parent=0 // pred_region
    _
  $region21: #{residual_block_nchw.1} parent=0 // pred_fallthru
    _
  // Predicated region
  $region22: #{residual_block_nchw.1} parent=0 // pred_check
    _
  $region23: #{residual_block_nchw.1} parent=0 // pred_check_branch
    %23 = sbr.rel (0) target = $region25
  $region24: #{residual_block_nchw.1} parent=0 // pred_region
    _
  $region25: #{residual_block_nchw.1} parent=0 // pred_fallthru
    _
  // Predicated region
  $region26: #{residual_block_nchw.1} parent=0 // pred_check
    _
  $region27: #{residual_block_nchw.1} parent=0 // pred_check_branch
    %25 = sbr.rel (0) target = $region29
  $region28: #{residual_block_nchw.1} parent=0 // pred_region
    _
  $region29: #{residual_block_nchw.1} parent=0 // pred_fallthru
    _
  %27 = vst [vmem:[#allocation2] sm:$0xff] 0
  %28 = vst [vmem:[#allocation2 + $0x10] sm:$0xff] 0
  %v29 = vld [vmem:[%s0] sm:$0xff]
  %v30 = vld [vmem:[%s0 + $0x8] sm:$0xff]
  %v31 = vpack.c.bf16 %v30, %v29
  %32 = vst [vmem:[#allocation2 + $0x8] sm:$0xff] %v31
  %v33 = vld [vmem:[#allocation2] sm:$0x80]
  %v34 = vld [vmem:[#allocation2 + $0x8] sm:$0xff]
  %v35 = vld [vmem:[%s1] sm:$0xf]
  %v36 = vld [vmem:[%s1 + $0x4] sm:$0xf]
  %v37 = vld [vmem:[%s1 + $0x8] sm:$0xf]
  %v38 = vld [vmem:[%s1 + $0xc] sm:$0xf]
  %v39 = vld [vmem:[%s1 + $0x10] sm:$0xf]
  %v40 = vld [vmem:[%s1 + $0x14] sm:$0xf]
  %v41 = vld [vmem:[%s1 + $0x18] sm:$0xf]
  %v42 = vld [vmem:[%s1 + $0x1c] sm:$0xf]
  %v43 = vld [vmem:[%s1 + $0x20] sm:$0xf]
  %v44 = vld [vmem:[%s1 + $0x24] sm:$0xf]
  %v45 = vld [vmem:[%s1 + $0x28] sm:$0xf]
  %v46 = vld [vmem:[%s1 + $0x2c] sm:$0xf]
  %v47 = vld [vmem:[%s1 + $0x30] sm:$0xf]
  %v48 = vld [vmem:[%s1 + $0x34] sm:$0xf]
  %v49 = vld [vmem:[%s1 + $0x38] sm:$0xf]
  %v50 = vld [vmem:[%s1 + $0x3c] sm:$0xf]
  %s51 = scalar_lea.vmem %s1, 64
  %v52 = vld [vmem:[%s51] sm:$0xf]
  %v53 = vld [vmem:[%s51 + $0x4] sm:$0xf]
  %v54 = vld [vmem:[%s51 + $0x8] sm:$0xf]
  %v55 = vld [vmem:[%s51 + $0xc] sm:$0xf]
  %v56 = vld [vmem:[%s51 + $0x10] sm:$0xf]
  %v57 = vld [vmem:[%s51 + $0x14] sm:$0xf]
  %v58 = vld [vmem:[%s51 + $0x18] sm:$0xf]
  %v59 = vld [vmem:[%s51 + $0x1c] sm:$0xf]
  %v60 = vld [vmem:[%s51 + $0x20] sm:$0xf]
  %v61 = vld [vmem:[%s51 + $0x24] sm:$0xf]
  %v62 = vld [vmem:[%s51 + $0x28] sm:$0xf]
  %v63 = vld [vmem:[%s51 + $0x2c] sm:$0xf]
  %v64 = vld [vmem:[%s51 + $0x30] sm:$0xf]
  %v65 = vld [vmem:[%s51 + $0x34] sm:$0xf]
  %v66 = vld [vmem:[%s51 + $0x38] sm:$0xf]
  %v67 = vld [vmem:[%s51 + $0x3c] sm:$0xf]
  %v84 = vunpack.c.l.b16 %v52
  %v85 = vunpack.c.l.b16 %v53
  %v86 = vunpack.c.l.b16 %v54
  %v87 = vunpack.c.l.b16 %v55
  %v88 = vunpack.c.l.b16 %v56
  %v89 = vunpack.c.l.b16 %v57
  %v90 = vunpack.c.l.b16 %v58
  %v91 = vunpack.c.l.b16 %v59
  %v92 = vunpack.c.l.b16 %v60
  %v93 = vunpack.c.l.b16 %v61
  %v94 = vunpack.c.l.b16 %v62
  %v95 = vunpack.c.l.b16 %v63
  %v96 = vunpack.c.l.b16 %v64
  %v97 = vunpack.c.l.b16 %v65
  %v98 = vunpack.c.l.b16 %v66
  %v99 = vunpack.c.l.b16 %v67
  %v100 = vpack.c.b16 %v85, %v84
  %v101 = vpack.c.b16 %v87, %v86
  %v102 = vpack.c.b16 %v89, %v88
  %v103 = vpack.c.b16 %v91, %v90
  %v104 = vpack.c.b16 %v93, %v92
  %v105 = vpack.c.b16 %v95, %v94
  %v106 = vpack.c.b16 %v97, %v96
  %v107 = vpack.c.b16 %v99, %v98
  %116 = vmatprep.subr.bf16.mxu0 0
  %117 = vmatpush1.bf16.msra.mxu0 %v100
  %118 = vmatprep.subr.bf16.mxu0 0
  %119 = vmatpush1.bf16.msra.mxu0 %v101
  %120 = vmatprep.subr.bf16.mxu0 0
  %121 = vmatpush1.bf16.msra.mxu0 %v102
  %122 = vmatprep.subr.bf16.mxu0 0
  %123 = vmatpush1.bf16.msra.mxu0 %v103
  %124 = vmatprep.subr.bf16.mxu0 0
  %125 = vmatpush1.bf16.msra.mxu0 %v104
  %126 = vmatprep.subr.bf16.mxu0 0
  %127 = vmatpush1.bf16.msra.mxu0 %v105
  %128 = vmatprep.subr.bf16.mxu0 0
  %129 = vmatpush1.bf16.msra.mxu0 %v106
  %130 = vmatprep.subr.bf16.mxu0 0
  %131 = vmatpush1.bf16.msra.mxu0 %v107
  %132 = vmatprep.subr.bf16.mxu0 0
  %133 = vmatpush1.bf16.msra.mxu0 0
  %134 = vmatprep.subr.bf16.mxu0 0
  %135 = vmatpush1.bf16.msra.mxu0 0
  %136 = vmatprep.subr.bf16.mxu0 0
  %137 = vmatpush1.bf16.msra.mxu0 0
  %138 = vmatprep.subr.bf16.mxu0 0
  %139 = vmatpush1.bf16.msra.mxu0 0
  %140 = vmatprep.subr.bf16.mxu0 0
  %141 = vmatpush1.bf16.msra.mxu0 0
  %142 = vmatprep.subr.bf16.mxu0 0
  %143 = vmatpush1.bf16.msra.mxu0 0
  %144 = vmatprep.subr.bf16.mxu0 0
  %145 = vmatpush1.bf16.msra.mxu0 0
  %146 = vmatprep.subr.bf16.mxu0 0
  %147 = vmatpush1.bf16.msra.mxu0 0
  %148 = vmatprep.mubr.bf16.mxu0 0
  %149 = vmatmul.mubr.bf16.gmra.mrb[0].mxu0 %v34
  %v150 = vpop.f32.mrb[0].mxu0
  %v151 = vadd.f32 0.0, %v150
  %v152 = vpop.f32.mrb[0].mxu0
  %v153 = vpop.f32.mrb[0].mxu0
  %v154 = vadd.f32 0.0, %v153
  %v155 = vpop.f32.mrb[0].mxu0
  %156 = vdwg.mxu0
  %vm157 = vsmask.f32 256
  %v159 = vshrl.u32 %v33, 16
  %v161 = vrot.slane %v159, 7
  %v163 = vshrl.u32 %v34, 16
  %v165 = vrot.slane %v163, 7
  %v166 = vshll.u32 %v34, 16
  %v168 = vor.u32 %v165, %v166
  %v169 = vsel %vm157, %v161, %v168
  %v187 = vunpack.c.l.b16 %v35
  %v188 = vunpack.c.l.b16 %v36
  %v189 = vunpack.c.l.b16 %v37
  %v190 = vunpack.c.l.b16 %v38
  %v191 = vunpack.c.l.b16 %v39
  %v192 = vunpack.c.l.b16 %v40
  %v193 = vunpack.c.l.b16 %v41
  %v194 = vunpack.c.l.b16 %v42
  %v195 = vunpack.c.l.b16 %v43
  %v196 = vunpack.c.l.b16 %v44
  %v197 = vunpack.c.l.b16 %v45
  %v198 = vunpack.c.l.b16 %v46
  %v199 = vunpack.c.l.b16 %v47
  %v200 = vunpack.c.l.b16 %v48
  %v201 = vunpack.c.l.b16 %v49
  %v202 = vunpack.c.l.b16 %v50
  %v203 = vpack.c.b16 %v188, %v187
  %v204 = vpack.c.b16 %v190, %v189
  %v205 = vpack.c.b16 %v192, %v191
  %v206 = vpack.c.b16 %v194, %v193
  %v207 = vpack.c.b16 %v196, %v195
  %v208 = vpack.c.b16 %v198, %v197
  %v209 = vpack.c.b16 %v200, %v199
  %v210 = vpack.c.b16 %v202, %v201
  %219 = vmatprep.subr.bf16.mxu0 0
  %220 = vmatpush1.bf16.msra.mxu0 %v203
  %221 = vmatprep.subr.bf16.mxu0 0
  %222 = vmatpush1.bf16.msra.mxu0 %v204
  %223 = vmatprep.subr.bf16.mxu0 0
  %224 = vmatpush1.bf16.msra.mxu0 %v205
  %225 = vmatprep.subr.bf16.mxu0 0
  %226 = vmatpush1.bf16.msra.mxu0 %v206
  %227 = vmatprep.subr.bf16.mxu0 0
  %228 = vmatpush1.bf16.msra.mxu0 %v207
  %229 = vmatprep.subr.bf16.mxu0 0
  %230 = vmatpush1.bf16.msra.mxu0 %v208
  %231 = vmatprep.subr.bf16.mxu0 0
  %232 = vmatpush1.bf16.msra.mxu0 %v209
  %233 = vmatprep.subr.bf16.mxu0 0
  %234 = vmatpush1.bf16.msra.mxu0 %v210
  %235 = vmatprep.subr.bf16.mxu0 0
  %236 = vmatpush1.bf16.msra.mxu0 0
  %237 = vmatprep.subr.bf16.mxu0 0
  %238 = vmatpush1.bf16.msra.mxu0 0
  %239 = vmatprep.subr.bf16.mxu0 0
  %240 = vmatpush1.bf16.msra.mxu0 0
  %241 = vmatprep.subr.bf16.mxu0 0
  %242 = vmatpush1.bf16.msra.mxu0 0
  %243 = vmatprep.subr.bf16.mxu0 0
  %244 = vmatpush1.bf16.msra.mxu0 0
  %245 = vmatprep.subr.bf16.mxu0 0
  %246 = vmatpush1.bf16.msra.mxu0 0
  %247 = vmatprep.subr.bf16.mxu0 0
  %248 = vmatpush1.bf16.msra.mxu0 0
  %249 = vmatprep.subr.bf16.mxu0 0
  %250 = vmatpush1.bf16.msra.mxu0 0
  %251 = vmatprep.mubr.bf16.mxu0 0
  %252 = vmatmul.mubr.bf16.gmra.mrb[0].mxu0 %v169
  %v253 = vpop.f32.mrb[0].mxu0
  %v254 = vadd.f32 %v151, %v253
  %v255 = vpop.f32.mrb[0].mxu0
  %v256 = vpop.f32.mrb[0].mxu0
  %v257 = vadd.f32 %v154, %v256
  %v258 = vpop.f32.mrb[0].mxu0
  %259 = vdwg.mxu0
  %v260 = vld [vmem:[#allocation2 + $0x8] sm:$0xff]
  %v261 = vld [vmem:[#allocation2 + $0x10] sm:$0x1]
  %s262 = scalar_lea.vmem %s1, 128
  %v263 = vld [vmem:[%s262] sm:$0xf]
  %v264 = vld [vmem:[%s262 + $0x4] sm:$0xf]
  %v265 = vld [vmem:[%s262 + $0x8] sm:$0xf]
  %v266 = vld [vmem:[%s262 + $0xc] sm:$0xf]
  %v267 = vld [vmem:[%s262 + $0x10] sm:$0xf]
  %v268 = vld [vmem:[%s262 + $0x14] sm:$0xf]
  %v269 = vld [vmem:[%s262 + $0x18] sm:$0xf]
  %v270 = vld [vmem:[%s262 + $0x1c] sm:$0xf]
  %v271 = vld [vmem:[%s262 + $0x20] sm:$0xf]
  %v272 = vld [vmem:[%s262 + $0x24] sm:$0xf]
  %v273 = vld [vmem:[%s262 + $0x28] sm:$0xf]
  %v274 = vld [vmem:[%s262 + $0x2c] sm:$0xf]
  %v275 = vld [vmem:[%s262 + $0x30] sm:$0xf]
  %v276 = vld [vmem:[%s262 + $0x34] sm:$0xf]
  %v277 = vld [vmem:[%s262 + $0x38] sm:$0xf]
  %v278 = vld [vmem:[%s262 + $0x3c] sm:$0xf]
  %vm279 = vsmask.f32 7424
  %v281 = vshrl.u32 %v260, 16
  %v283 = vshll.u32 %v260, 16
  %v285 = vrot.slane %v283, 1
  %v286 = vor.u32 %v281, %v285
  %v288 = vshll.u32 %v261, 16
  %v290 = vrot.slane %v288, 1
  %v291 = vsel %vm279, %v286, %v290
  %v309 = vunpack.c.l.b16 %v263
  %v310 = vunpack.c.l.b16 %v264
  %v311 = vunpack.c.l.b16 %v265
  %v312 = vunpack.c.l.b16 %v266
  %v313 = vunpack.c.l.b16 %v267
  %v314 = vunpack.c.l.b16 %v268
  %v315 = vunpack.c.l.b16 %v269
  %v316 = vunpack.c.l.b16 %v270
  %v317 = vunpack.c.l.b16 %v271
  %v318 = vunpack.c.l.b16 %v272
  %v319 = vunpack.c.l.b16 %v273
  %v320 = vunpack.c.l.b16 %v274
  %v321 = vunpack.c.l.b16 %v275
  %v322 = vunpack.c.l.b16 %v276
  %v323 = vunpack.c.l.b16 %v277
  %v324 = vunpack.c.l.b16 %v278
  %v325 = vpack.c.b16 %v310, %v309
  %v326 = vpack.c.b16 %v312, %v311
  %v327 = vpack.c.b16 %v314, %v313
  %v328 = vpack.c.b16 %v316, %v315
  %v329 = vpack.c.b16 %v318, %v317
  %v330 = vpack.c.b16 %v320, %v319
  %v331 = vpack.c.b16 %v322, %v321
  %v332 = vpack.c.b16 %v324, %v323
  %341 = vmatprep.subr.bf16.mxu0 0
  %342 = vmatpush1.bf16.msra.mxu0 %v325
  %343 = vmatprep.subr.bf16.mxu0 0
  %344 = vmatpush1.bf16.msra.mxu0 %v326
  %345 = vmatprep.subr.bf16.mxu0 0
  %346 = vmatpush1.bf16.msra.mxu0 %v327
  %347 = vmatprep.subr.bf16.mxu0 0
  %348 = vmatpush1.bf16.msra.mxu0 %v328
  %349 = vmatprep.subr.bf16.mxu0 0
  %350 = vmatpush1.bf16.msra.mxu0 %v329
  %351 = vmatprep.subr.bf16.mxu0 0
  %352 = vmatpush1.bf16.msra.mxu0 %v330
  %353 = vmatprep.subr.bf16.mxu0 0
  %354 = vmatpush1.bf16.msra.mxu0 %v331
  %355 = vmatprep.subr.bf16.mxu0 0
  %356 = vmatpush1.bf16.msra.mxu0 %v332
  %357 = vmatprep.subr.bf16.mxu0 0
  %358 = vmatpush1.bf16.msra.mxu0 0
  %359 = vmatprep.subr.bf16.mxu0 0
  %360 = vmatpush1.bf16.msra.mxu0 0
  %361 = vmatprep.subr.bf16.mxu0 0
  %362 = vmatpush1.bf16.msra.mxu0 0
  %363 = vmatprep.subr.bf16.mxu0 0
  %364 = vmatpush1.bf16.msra.mxu0 0
  %365 = vmatprep.subr.bf16.mxu0 0
  %366 = vmatpush1.bf16.msra.mxu0 0
  %367 = vmatprep.subr.bf16.mxu0 0
  %368 = vmatpush1.bf16.msra.mxu0 0
  %369 = vmatprep.subr.bf16.mxu0 0
  %370 = vmatpush1.bf16.msra.mxu0 0
  %371 = vmatprep.subr.bf16.mxu0 0
  %372 = vmatpush1.bf16.msra.mxu0 0
  %373 = vmatprep.mubr.bf16.mxu0 0
  %374 = vmatmul.mubr.bf16.gmra.mrb[0].mxu0 %v291
  %v375 = vpop.f32.mrb[0].mxu0
  %v376 = vadd.f32 0.0, %v375
  %v377 = vpop.f32.mrb[0].mxu0
  %v378 = vpop.f32.mrb[0].mxu0
  %v379 = vadd.f32 0.0, %v378
  %v380 = vpop.f32.mrb[0].mxu0
  %381 = vdwg.mxu0
  %v382 = vadd.f32 %v254, %v376
  %v383 = vadd.f32 %v257, %v379
  %v384 = vadd.f32 %v382, %v383
  %v385 = vrot.slane %v384, 4
  %v386 = vadd.f32 %v384, %v385
  %v387 = vrot.slane %v386, 2
  %v388 = vadd.f32 %v386, %v387
  %v389 = vrot.slane %v388, 1
  %v390 = vadd.f32 %v388, %v389
  %v391 = vmul.f32 %v382, %v382
  %v392 = vmul.f32 %v383, %v383
  %v393 = vadd.f32 %v391, %v392
  %v394 = vrot.slane %v393, 4
  %v395 = vadd.f32 %v393, %v394
  %v396 = vrot.slane %v395, 2
  %v397 = vadd.f32 %v395, %v396
  %v398 = vrot.slane %v397, 1
  %v399 = vadd.f32 %v397, %v398
  %vm400 = vcmask 1040384
  %v401 = vsel %vm400, %v390, %v399
  %402 = vrot.lane.b32.xlu0 %v401, 4
  %v403 = vpop.permute.xlu0 %402
  %v404 = vadd.f32 %v401, %v403
  %405 = vrot.lane.b32.xlu0 %v404, 8
  %v406 = vpop.permute.xlu0 %405
  %v407 = vadd.f32 %v404, %v406
  %408 = vrot.lane.b32.xlu0 %v407, 16
  %v409 = vpop.permute.xlu0 %408
  %v410 = vadd.f32 %v407, %v409
  %411 = vrot.lane.b32.xlu0 %v410, 32
  %v412 = vpop.permute.xlu0 %411
  %v413 = vadd.f32 %v410, %v412
  %414 = vrot.lane.b32.xlu0 %v413, 64
  %v415 = vpop.permute.xlu0 %414
  %v416 = vadd.f32 %v413, %v415
  %v417 = vmul.f32 %v416, 0.001953125
  %v418 = vmul.f32 %v417, %v417
  %v420 = vrot.slane %v418, 7
  %v422 = vsub.f32 %v417, %v420
  %v423 = vadd.f32 %v422, 1e-05
  %v424 = vrsqrt.pop %v423
  %v425 = vld [vmem:[%s2] sm:$0x1]
  %v428 = vunpack.c.l.s4 1966171168
  %v429 = vunpack.c.0.s8 %v428
  %v430 = vlaneseq
  %v431 = vshrl.u32 %v430, 7
  %v432 = vsub.s32 %v429, %v431
  %v433 = vrot.slane %v424, %v432
  %v434 = vcombine.high %v433, %v433
  %v436 = vunpack.c.l.s4 1966171168
  %v437 = vunpack.c.0.s8 %v436
  %v438 = vlaneseq
  %v439 = vshrl.u32 %v438, 7
  %v440 = vsub.s32 %v437, %v439
  %v441 = vrot.slane %v434, %v440
  %v443 = vmul.f32 %v425, %v441
  %v444 = vld [vmem:[%s3] sm:$0x1]
  %v445 = vmul.f32 %v417, %v443
  %v446 = vsub.f32 %v444, %v445
  %v448 = vlaneseq
  %v449 = vshrl.u32 %v448, 7
  %v450 = vsub.s32 0, %v449
  %v451 = vrot.slane %v443, %v450
  %v453 = vmul.f32 %v382, %v451
  %v454 = vmul.f32 %v383, %v451
  %v456 = vlaneseq
  %v457 = vshrl.u32 %v456, 7
  %v458 = vsub.s32 0, %v457
  %v459 = vrot.slane %v446, %v458
  %v461 = vadd.f32 %v453, %v459
  %v462 = vadd.f32 %v454, %v459
  %v463 = vmax.f32 %v461, 0.0
  %v464 = vmax.f32 %v462, 0.0
  %v465 = vpack.c.bf16 %v464, %v463
  %466 = vst [vmem:[#allocation2 + $0x8] sm:$0xff] %v465
  %v467 = vld [vmem:[#allocation2] sm:$0x80]
  %v468 = vld [vmem:[#allocation2 + $0x8] sm:$0xff]
  %v469 = vld [vmem:[%s4] sm:$0xf]
  %v470 = vld [vmem:[%s4 + $0x4] sm:$0xf]
  %v471 = vld [vmem:[%s4 + $0x8] sm:$0xf]
  %v472 = vld [vmem:[%s4 + $0xc] sm:$0xf]
  %v473 = vld [vmem:[%s4 + $0x10] sm:$0xf]
  %v474 = vld [vmem:[%s4 + $0x14] sm:$0xf]
  %v475 = vld [vmem:[%s4 + $0x18] sm:$0xf]
  %v476 = vld [vmem:[%s4 + $0x1c] sm:$0xf]
  %v477 = vld [vmem:[%s4 + $0x20] sm:$0xf]
  %v478 = vld [vmem:[%s4 + $0x24] sm:$0xf]
  %v479 = vld [vmem:[%s4 + $0x28] sm:$0xf]
  %v480 = vld [vmem:[%s4 + $0x2c] sm:$0xf]
  %v481 = vld [vmem:[%s4 + $0x30] sm:$0xf]
  %v482 = vld [vmem:[%s4 + $0x34] sm:$0xf]
  %v483 = vld [vmem:[%s4 + $0x38] sm:$0xf]
  %v484 = vld [vmem:[%s4 + $0x3c] sm:$0xf]
  %s485 = scalar_lea.vmem %s4, 64
  %v486 = vld [vmem:[%s485] sm:$0xf]
  %v487 = vld [vmem:[%s485 + $0x4] sm:$0xf]
  %v488 = vld [vmem:[%s485 + $0x8] sm:$0xf]
  %v489 = vld [vmem:[%s485 + $0xc] sm:$0xf]
  %v490 = vld [vmem:[%s485 + $0x10] sm:$0xf]
  %v491 = vld [vmem:[%s485 + $0x14] sm:$0xf]
  %v492 = vld [vmem:[%s485 + $0x18] sm:$0xf]
  %v493 = vld [vmem:[%s485 + $0x1c] sm:$0xf]
  %v494 = vld [vmem:[%s485 + $0x20] sm:$0xf]
  %v495 = vld [vmem:[%s485 + $0x24] sm:$0xf]
  %v496 = vld [vmem:[%s485 + $0x28] sm:$0xf]
  %v497 = vld [vmem:[%s485 + $0x2c] sm:$0xf]
  %v498 = vld [vmem:[%s485 + $0x30] sm:$0xf]
  %v499 = vld [vmem:[%s485 + $0x34] sm:$0xf]
  %v500 = vld [vmem:[%s485 + $0x38] sm:$0xf]
  %v501 = vld [vmem:[%s485 + $0x3c] sm:$0xf]
  %v518 = vunpack.c.l.b16 %v486
  %v519 = vunpack.c.l.b16 %v487
  %v520 = vunpack.c.l.b16 %v488
  %v521 = vunpack.c.l.b16 %v489
  %v522 = vunpack.c.l.b16 %v490
  %v523 = vunpack.c.l.b16 %v491
  %v524 = vunpack.c.l.b16 %v492
  %v525 = vunpack.c.l.b16 %v493
  %v526 = vunpack.c.l.b16 %v494
  %v527 = vunpack.c.l.b16 %v495
  %v528 = vunpack.c.l.b16 %v496
  %v529 = vunpack.c.l.b16 %v497
  %v530 = vunpack.c.l.b16 %v498
  %v531 = vunpack.c.l.b16 %v499
  %v532 = vunpack.c.l.b16 %v500
  %v533 = vunpack.c.l.b16 %v501
  %v534 = vpack.c.b16 %v519, %v518
  %v535 = vpack.c.b16 %v521, %v520
  %v536 = vpack.c.b16 %v523, %v522
  %v537 = vpack.c.b16 %v525, %v524
  %v538 = vpack.c.b16 %v527, %v526
  %v539 = vpack.c.b16 %v529, %v528
  %v540 = vpack.c.b16 %v531, %v530
  %v541 = vpack.c.b16 %v533, %v532
  %550 = vmatprep.subr.bf16.mxu0 0
  %551 = vmatpush1.bf16.msra.mxu0 %v534
  %552 = vmatprep.subr.bf16.mxu0 0
  %553 = vmatpush1.bf16.msra.mxu0 %v535
  %554 = vmatprep.subr.bf16.mxu0 0
  %555 = vmatpush1.bf16.msra.mxu0 %v536
  %556 = vmatprep.subr.bf16.mxu0 0
  %557 = vmatpush1.bf16.msra.mxu0 %v537
  %558 = vmatprep.subr.bf16.mxu0 0
  %559 = vmatpush1.bf16.msra.mxu0 %v538
  %560 = vmatprep.subr.bf16.mxu0 0
  %561 = vmatpush1.bf16.msra.mxu0 %v539
  %562 = vmatprep.subr.bf16.mxu0 0
  %563 = vmatpush1.bf16.msra.mxu0 %v540
  %564 = vmatprep.subr.bf16.mxu0 0
  %565 = vmatpush1.bf16.msra.mxu0 %v541
  %566 = vmatprep.subr.bf16.mxu0 0
  %567 = vmatpush1.bf16.msra.mxu0 0
  %568 = vmatprep.subr.bf16.mxu0 0
  %569 = vmatpush1.bf16.msra.mxu0 0
  %570 = vmatprep.subr.bf16.mxu0 0
  %571 = vmatpush1.bf16.msra.mxu0 0
  %572 = vmatprep.subr.bf16.mxu0 0
  %573 = vmatpush1.bf16.msra.mxu0 0
  %574 = vmatprep.subr.bf16.mxu0 0
  %575 = vmatpush1.bf16.msra.mxu0 0
  %576 = vmatprep.subr.bf16.mxu0 0
  %577 = vmatpush1.bf16.msra.mxu0 0
  %578 = vmatprep.subr.bf16.mxu0 0
  %579 = vmatpush1.bf16.msra.mxu0 0
  %580 = vmatprep.subr.bf16.mxu0 0
  %581 = vmatpush1.bf16.msra.mxu0 0
  %582 = vmatprep.mubr.bf16.mxu0 0
  %583 = vmatmul.mubr.bf16.gmra.mrb[0].mxu0 %v468
  %v584 = vpop.f32.mrb[0].mxu0
  %v585 = vadd.f32 0.0, %v584
  %v586 = vpop.f32.mrb[0].mxu0
  %v587 = vpop.f32.mrb[0].mxu0
  %v588 = vadd.f32 0.0, %v587
  %v589 = vpop.f32.mrb[0].mxu0
  %590 = vdwg.mxu0
  %v592 = vshrl.u32 %v467, 16
  %v594 = vrot.slane %v592, 7
  %v596 = vshrl.u32 %v468, 16
  %v598 = vrot.slane %v596, 7
  %v599 = vshll.u32 %v468, 16
  %v601 = vor.u32 %v598, %v599
  %v602 = vsel %vm157, %v594, %v601
  %v620 = vunpack.c.l.b16 %v469
  %v621 = vunpack.c.l.b16 %v470
  %v622 = vunpack.c.l.b16 %v471
  %v623 = vunpack.c.l.b16 %v472
  %v624 = vunpack.c.l.b16 %v473
  %v625 = vunpack.c.l.b16 %v474
  %v626 = vunpack.c.l.b16 %v475
  %v627 = vunpack.c.l.b16 %v476
  %v628 = vunpack.c.l.b16 %v477
  %v629 = vunpack.c.l.b16 %v478
  %v630 = vunpack.c.l.b16 %v479
  %v631 = vunpack.c.l.b16 %v480
  %v632 = vunpack.c.l.b16 %v481
  %v633 = vunpack.c.l.b16 %v482
  %v634 = vunpack.c.l.b16 %v483
  %v635 = vunpack.c.l.b16 %v484
  %v636 = vpack.c.b16 %v621, %v620
  %v637 = vpack.c.b16 %v623, %v622
  %v638 = vpack.c.b16 %v625, %v624
  %v639 = vpack.c.b16 %v627, %v626
  %v640 = vpack.c.b16 %v629, %v628
  %v641 = vpack.c.b16 %v631, %v630
  %v642 = vpack.c.b16 %v633, %v632
  %v643 = vpack.c.b16 %v635, %v634
  %652 = vmatprep.subr.bf16.mxu0 0
  %653 = vmatpush1.bf16.msra.mxu0 %v636
  %654 = vmatprep.subr.bf16.mxu0 0
  %655 = vmatpush1.bf16.msra.mxu0 %v637
  %656 = vmatprep.subr.bf16.mxu0 0
  %657 = vmatpush1.bf16.msra.mxu0 %v638
  %658 = vmatprep.subr.bf16.mxu0 0
  %659 = vmatpush1.bf16.msra.mxu0 %v639
  %660 = vmatprep.subr.bf16.mxu0 0
  %661 = vmatpush1.bf16.msra.mxu0 %v640
  %662 = vmatprep.subr.bf16.mxu0 0
  %663 = vmatpush1.bf16.msra.mxu0 %v641
  %664 = vmatprep.subr.bf16.mxu0 0
  %665 = vmatpush1.bf16.msra.mxu0 %v642
  %666 = vmatprep.subr.bf16.mxu0 0
  %667 = vmatpush1.bf16.msra.mxu0 %v643
  %668 = vmatprep.subr.bf16.mxu0 0
  %669 = vmatpush1.bf16.msra.mxu0 0
  %670 = vmatprep.subr.bf16.mxu0 0
  %671 = vmatpush1.bf16.msra.mxu0 0
  %672 = vmatprep.subr.bf16.mxu0 0
  %673 = vmatpush1.bf16.msra.mxu0 0
  %674 = vmatprep.subr.bf16.mxu0 0
  %675 = vmatpush1.bf16.msra.mxu0 0
  %676 = vmatprep.subr.bf16.mxu0 0
  %677 = vmatpush1.bf16.msra.mxu0 0
  %678 = vmatprep.subr.bf16.mxu0 0
  %679 = vmatpush1.bf16.msra.mxu0 0
  %680 = vmatprep.subr.bf16.mxu0 0
  %681 = vmatpush1.bf16.msra.mxu0 0
  %682 = vmatprep.subr.bf16.mxu0 0
  %683 = vmatpush1.bf16.msra.mxu0 0
  %684 = vmatprep.mubr.bf16.mxu0 0
  %685 = vmatmul.mubr.bf16.gmra.mrb[0].mxu0 %v602
  %v686 = vpop.f32.mrb[0].mxu0
  %v687 = vadd.f32 %v585, %v686
  %v688 = vpop.f32.mrb[0].mxu0
  %v689 = vpop.f32.mrb[0].mxu0
  %v690 = vadd.f32 %v588, %v689
  %v691 = vpop.f32.mrb[0].mxu0
  %692 = vdwg.mxu0
  %v693 = vld [vmem:[#allocation2 + $0x8] sm:$0xff]
  %v694 = vld [vmem:[#allocation2 + $0x10] sm:$0x1]
  %s695 = scalar_lea.vmem %s4, 128
  %v696 = vld [vmem:[%s695] sm:$0xf]
  %v697 = vld [vmem:[%s695 + $0x4] sm:$0xf]
  %v698 = vld [vmem:[%s695 + $0x8] sm:$0xf]
  %v699 = vld [vmem:[%s695 + $0xc] sm:$0xf]
  %v700 = vld [vmem:[%s695 + $0x10] sm:$0xf]
  %v701 = vld [vmem:[%s695 + $0x14] sm:$0xf]
  %v702 = vld [vmem:[%s695 + $0x18] sm:$0xf]
  %v703 = vld [vmem:[%s695 + $0x1c] sm:$0xf]
  %v704 = vld [vmem:[%s695 + $0x20] sm:$0xf]
  %v705 = vld [vmem:[%s695 + $0x24] sm:$0xf]
  %v706 = vld [vmem:[%s695 + $0x28] sm:$0xf]
  %v707 = vld [vmem:[%s695 + $0x2c] sm:$0xf]
  %v708 = vld [vmem:[%s695 + $0x30] sm:$0xf]
  %v709 = vld [vmem:[%s695 + $0x34] sm:$0xf]
  %v710 = vld [vmem:[%s695 + $0x38] sm:$0xf]
  %v711 = vld [vmem:[%s695 + $0x3c] sm:$0xf]
  %v713 = vshrl.u32 %v693, 16
  %v715 = vshll.u32 %v693, 16
  %v717 = vrot.slane %v715, 1
  %v718 = vor.u32 %v713, %v717
  %v720 = vshll.u32 %v694, 16
  %v722 = vrot.slane %v720, 1
  %v723 = vsel %vm279, %v718, %v722
  %v741 = vunpack.c.l.b16 %v696
  %v742 = vunpack.c.l.b16 %v697
  %v743 = vunpack.c.l.b16 %v698
  %v744 = vunpack.c.l.b16 %v699
  %v745 = vunpack.c.l.b16 %v700
  %v746 = vunpack.c.l.b16 %v701
  %v747 = vunpack.c.l.b16 %v702
  %v748 = vunpack.c.l.b16 %v703
  %v749 = vunpack.c.l.b16 %v704
  %v750 = vunpack.c.l.b16 %v705
  %v751 = vunpack.c.l.b16 %v706
  %v752 = vunpack.c.l.b16 %v707
  %v753 = vunpack.c.l.b16 %v708
  %v754 = vunpack.c.l.b16 %v709
  %v755 = vunpack.c.l.b16 %v710
  %v756 = vunpack.c.l.b16 %v711
  %v757 = vpack.c.b16 %v742, %v741
  %v758 = vpack.c.b16 %v744, %v743
  %v759 = vpack.c.b16 %v746, %v745
  %v760 = vpack.c.b16 %v748, %v747
  %v761 = vpack.c.b16 %v750, %v749
  %v762 = vpack.c.b16 %v752, %v751
  %v763 = vpack.c.b16 %v754, %v753
  %v764 = vpack.c.b16 %v756, %v755
  %773 = vmatprep.subr.bf16.mxu0 0
  %774 = vmatpush1.bf16.msra.mxu0 %v757
  %775 = vmatprep.subr.bf16.mxu0 0
  %776 = vmatpush1.bf16.msra.mxu0 %v758
  %777 = vmatprep.subr.bf16.mxu0 0
  %778 = vmatpush1.bf16.msra.mxu0 %v759
  %779 = vmatprep.subr.bf16.mxu0 0
  %780 = vmatpush1.bf16.msra.mxu0 %v760
  %781 = vmatprep.subr.bf16.mxu0 0
  %782 = vmatpush1.bf16.msra.mxu0 %v761
  %783 = vmatprep.subr.bf16.mxu0 0
  %784 = vmatpush1.bf16.msra.mxu0 %v762
  %785 = vmatprep.subr.bf16.mxu0 0
  %786 = vmatpush1.bf16.msra.mxu0 %v763
  %787 = vmatprep.subr.bf16.mxu0 0
  %788 = vmatpush1.bf16.msra.mxu0 %v764
  %789 = vmatprep.subr.bf16.mxu0 0
  %790 = vmatpush1.bf16.msra.mxu0 0
  %791 = vmatprep.subr.bf16.mxu0 0
  %792 = vmatpush1.bf16.msra.mxu0 0
  %793 = vmatprep.subr.bf16.mxu0 0
  %794 = vmatpush1.bf16.msra.mxu0 0
  %795 = vmatprep.subr.bf16.mxu0 0
  %796 = vmatpush1.bf16.msra.mxu0 0
  %797 = vmatprep.subr.bf16.mxu0 0
  %798 = vmatpush1.bf16.msra.mxu0 0
  %799 = vmatprep.subr.bf16.mxu0 0
  %800 = vmatpush1.bf16.msra.mxu0 0
  %801 = vmatprep.subr.bf16.mxu0 0
  %802 = vmatpush1.bf16.msra.mxu0 0
  %803 = vmatprep.subr.bf16.mxu0 0
  %804 = vmatpush1.bf16.msra.mxu0 0
  %805 = vmatprep.mubr.bf16.mxu0 0
  %806 = vmatmul.mubr.bf16.gmra.mrb[0].mxu0 %v723
  %v807 = vpop.f32.mrb[0].mxu0
  %v808 = vadd.f32 0.0, %v807
  %v809 = vpop.f32.mrb[0].mxu0
  %v810 = vpop.f32.mrb[0].mxu0
  %v811 = vadd.f32 0.0, %v810
  %v812 = vpop.f32.mrb[0].mxu0
  %813 = vdwg.mxu0
  %v814 = vadd.f32 %v687, %v808
  %v815 = vadd.f32 %v690, %v811
  %v816 = vadd.f32 %v814, %v815
  %v817 = vrot.slane %v816, 4
  %v818 = vadd.f32 %v816, %v817
  %v819 = vrot.slane %v818, 2
  %v820 = vadd.f32 %v818, %v819
  %v821 = vrot.slane %v820, 1
  %v822 = vadd.f32 %v820, %v821
  %v823 = vmul.f32 %v814, %v814
  %v824 = vmul.f32 %v815, %v815
  %v825 = vadd.f32 %v823, %v824
  %v826 = vrot.slane %v825, 4
  %v827 = vadd.f32 %v825, %v826
  %v828 = vrot.slane %v827, 2
  %v829 = vadd.f32 %v827, %v828
  %v830 = vrot.slane %v829, 1
  %v831 = vadd.f32 %v829, %v830
  %v832 = vsel %vm400, %v822, %v831
  %833 = vrot.lane.b32.xlu0 %v832, 4
  %v834 = vpop.permute.xlu0 %833
  %v835 = vadd.f32 %v832, %v834
  %836 = vrot.lane.b32.xlu0 %v835, 8
  %v837 = vpop.permute.xlu0 %836
  %v838 = vadd.f32 %v835, %v837
  %839 = vrot.lane.b32.xlu0 %v838, 16
  %v840 = vpop.permute.xlu0 %839
  %v841 = vadd.f32 %v838, %v840
  %842 = vrot.lane.b32.xlu0 %v841, 32
  %v843 = vpop.permute.xlu0 %842
  %v844 = vadd.f32 %v841, %v843
  %845 = vrot.lane.b32.xlu0 %v844, 64
  %v846 = vpop.permute.xlu0 %845
  %v847 = vadd.f32 %v844, %v846
  %v848 = vmul.f32 %v847, 0.001953125
  %v849 = vmul.f32 %v848, %v848
  %v851 = vrot.slane %v849, 7
  %v853 = vsub.f32 %v848, %v851
  %v854 = vadd.f32 %v853, 1e-05
  %v855 = vrsqrt.pop %v854
  %v856 = vld [vmem:[%s5] sm:$0x1]
  %v859 = vunpack.c.l.s4 1966171168
  %v860 = vunpack.c.0.s8 %v859
  %v861 = vlaneseq
  %v862 = vshrl.u32 %v861, 7
  %v863 = vsub.s32 %v860, %v862
  %v864 = vrot.slane %v855, %v863
  %v865 = vcombine.high %v864, %v864
  %v867 = vunpack.c.l.s4 1966171168
  %v868 = vunpack.c.0.s8 %v867
  %v869 = vlaneseq
  %v870 = vshrl.u32 %v869, 7
  %v871 = vsub.s32 %v868, %v870
  %v872 = vrot.slane %v865, %v871
  %v874 = vmul.f32 %v856, %v872
  %v875 = vld [vmem:[%s6] sm:$0x1]
  %v876 = vmul.f32 %v848, %v874
  %v877 = vsub.f32 %v875, %v876
  %v879 = vlaneseq
  %v880 = vshrl.u32 %v879, 7
  %v881 = vsub.s32 0, %v880
  %v882 = vrot.slane %v874, %v881
  %v884 = vmul.f32 %v814, %v882
  %v885 = vmul.f32 %v815, %v882
  %v887 = vlaneseq
  %v888 = vshrl.u32 %v887, 7
  %v889 = vsub.s32 0, %v888
  %v890 = vrot.slane %v877, %v889
  %v892 = vadd.f32 %v884, %v890
  %v893 = vadd.f32 %v885, %v890
  %v894 = vld [vmem:[%s0] sm:$0xff]
  %v895 = vld [vmem:[%s0 + $0x8] sm:$0xff]
  %v896 = vadd.f32 %v892, %v894
  %v897 = vadd.f32 %v893, %v895
  %v898 = vmax.f32 %v896, 0.0
  %v899 = vmax.f32 %v897, 0.0
  %900 = vst [vmem:[%s7] sm:$0xff] %v898
  %901 = vst [vmem:[%s7 + $0x8] sm:$0xff] %v899
  // Predicated region
  $region30: #{residual_block_nchw.1} parent=0 // pred_check
    _
  $region31: #{residual_block_nchw.1} parent=0 // pred_check_branch
    %903 = sbr.rel (0) target = $region33
  $region32: #{residual_block_nchw.1} parent=0 // pred_region
    _
  $region33: #{residual_block_nchw.1} parent=0 // pred_fallthru
    _
  // Predicated region
  $region34: #{residual_block_nchw.1} parent=0 // pred_check
    _
  $region35: #{residual_block_nchw.1} parent=0 // pred_check_branch
    %905 = sbr.rel (0) target = $region37
  $region36: #{residual_block_nchw.1} parent=0 // pred_region
    _
  $region37: #{residual_block_nchw.1} parent=0 // pred_fallthru
    _

</llo_original>
